<compile_context>
chip_gen: v5e
topology: v5e:2x2
jax: 0.10.0
libtpu: 0.0.40
codegen_flags: <defaults>
</compile_context>

<pallas_src>
import functools

import jax
import jax.numpy as jnp
from jax import lax
from jax.experimental import pallas as pl
from jax.experimental.pallas import tpu as pltpu


def _bilinear_kernel(wt_ref, x1_ref, x2_ref, o_ref, t_ref, *, compute_dtype):
    # wt_ref: (D1, D2)   -- pre-transposed, pre-scaled weight (shared, constant block)
    # x1_ref: (1, tm, D1)
    # x2_ref: (1, tn, D2)
    # o_ref : (1, tm, tn)
    # t_ref : VMEM (tm, D2) scratch -- caches x1_tile @ W_t across L2 tiles.

    # First matmul only on the first L2 tile of this (b, L1-tile); reused afterwards.
    @pl.when(pl.program_id(2) == 0)
    def _():
        x1 = x1_ref[0].astype(compute_dtype)          # (tm, D1)
        wt = wt_ref[...].astype(compute_dtype)        # (D1, D2)
        t = jnp.dot(x1, wt, preferred_element_type=jnp.float32)
        t_ref[...] = t.astype(t_ref.dtype)

    x2 = x2_ref[0].astype(compute_dtype)              # (tn, D2)
    t = t_ref[...]                                    # (tm, D2)
    # (tm, D2) x (tn, D2) contracting on the last dim of both -> (tm, tn).
    # No transpose is materialized; Mosaic feeds the MXU directly.
    s = lax.dot_general(
        t, x2,
        dimension_numbers=(((1,), (1,)), ((), ())),
        preferred_element_type=jnp.float32,
    )
    o_ref[0] = s.astype(o_ref.dtype)


def _pick_tile(n, candidates):
    """Largest candidate that evenly divides n; otherwise the full extent."""
    for c in candidates:
        if c <= n and n % c == 0:
            return c
    return n


def bilinear_comp_fn(weight, input1, input2, rescale=True, use_bf16_matmul=False):
    """Pallas implementation of BilinearCompFn.forward.

    weight : (in2_features, in1_features)   -- nn.Linear weight
    input1 : (B, L1, in1_features)
    input2 : (B, L2, in2_features)
    returns: (B, L1, L2)
    """
    B, L1, D1 = input1.shape
    B2, L2, D2 = input2.shape
    assert B == B2
    assert weight.shape == (D2, D1)

    scale = 1.0
    if rescale:
        scale = 1.0 / float((0.5 * (L1 + L2)) ** 0.5)

    # Fold the rescale into the (small) weight and pre-transpose it once in the
    # wrapper: (D2, D1) -> (D1, D2). Removes the in-kernel XLU transpose and
    # the B*L1*L2 VPU multiply.
    wt = (weight * jnp.asarray(scale, weight.dtype)).T

    # Tile sizes: 256-multiples preferred (v6e/v7x 256x256 MXU; fine on v5e too).
    # L1-tile needs to be a multiple of 8 (sublane), L2-tile a multiple of 128
    # (lane-dense output stores) -- or the full extent for small shapes.
    tm = _pick_tile(L1, (512, 256, 128, 64, 32, 16, 8))
    tn = _pick_tile(L2, (512, 256, 128))

    compute_dtype = jnp.bfloat16 if use_bf16_matmul else jnp.float32

    kernel = functools.partial(_bilinear_kernel, compute_dtype=compute_dtype)

    grid = (B, L1 // tm, L2 // tn)

    return pl.pallas_call(
        kernel,
        out_shape=jax.ShapeDtypeStruct((B, L1, L2), input1.dtype),
        grid_spec=pltpu.PrefetchScalarGridSpec(
            num_scalar_prefetch=0,
            grid=grid,
            in_specs=[
                # Shared weight: constant index_map -> fetched once, never re-DMAed.
                pl.BlockSpec((D1, D2), lambda b, i, j: (0, 0)),
                pl.BlockSpec((1, tm, D1), lambda b, i, j: (b, i, 0)),   # input1 tile
                pl.BlockSpec((1, tn, D2), lambda b, i, j: (b, j, 0)),   # input2 tile
            ],
            out_specs=pl.BlockSpec((1, tm, tn), lambda b, i, j: (b, i, j)),
            scratch_shapes=[
                # Cached intermediate t = x1_tile @ W_t, reused across L2 tiles.
                pltpu.VMEM((tm, D2), compute_dtype),
            ],
        ),
        compiler_params=pltpu.CompilerParams(
            # Batch / L1-tile are independent (v7x dual-TC sharding); the L2-tile
            # axis is innermost + arbitrary because it reuses the t scratch.
            dimension_semantics=("parallel", "parallel", "arbitrary"),
        ),
    )(wt, input1, input2)


if __name__ == "__main__":
    key = jax.random.PRNGKey(0)
    k_w, k_x1, k_x2 = jax.random.split(key, 3)

    B = 2
    L1, L2 = 8, 8
    in1_features, in2_features = 32, 32

    # Deterministic parameter init (mimics nn.Linear's uniform bound, fixed seed).
    bound = 1.0 / (in1_features ** 0.5)
    weight = jax.random.uniform(
        k_w, (in2_features, in1_features), jnp.float32, minval=-bound, maxval=bound
    )
    input1 = jax.random.normal(k_x1, (B, L1, in1_features), jnp.float32)
    input2 = jax.random.normal(k_x2, (B, L2, in2_features), jnp.float32)

    # Reference in plain JAX.
    trans1 = input1 @ weight.T
    ref = jnp.einsum("bld,bmd->blm", trans1, input2) / jnp.sqrt(0.5 * (L1 + L2))

    # Strict-f32 path.
    out = jax.block_until_ready(bilinear_comp_fn(weight, input1, input2, rescale=True))
    assert out.shape == (B, L1, L2)
    assert jnp.allclose(out, ref, atol=1e-5, rtol=1e-5)

    # bf16-MXU path (f32 accumulation) -- looser tolerance due to bf16 inputs.
    out_bf16 = jax.block_until_ready(
        bilinear_comp_fn(weight, input1, input2, rescale=True, use_bf16_matmul=True)
    )
    assert out_bf16.shape == (B, L1, L2)
    assert jnp.allclose(out_bf16, ref, atol=1e-1, rtol=5e-2)

    print("KERNEL_OK")
</pallas_src>

<mosaic_0001>
module attributes {stable_mosaic.version = 11 : i64} {
  func.func @_bilinear_kernel(%arg0: i32, %arg1: i32, %arg2: i32, %arg3: memref<32x32xf32, #tpu.memory_space<vmem>>, %arg4: memref<1x8x32xf32, #tpu.memory_space<vmem>>, %arg5: memref<1x8x32xf32, #tpu.memory_space<vmem>>, %arg6: memref<1x8x8xf32, #tpu.memory_space<vmem>>, %arg7: memref<8x32xf32, #tpu.memory_space<vmem>>) attributes {dimension_semantics = [#tpu.dimension_semantics<parallel>, #tpu.dimension_semantics<parallel>, #tpu.dimension_semantics<arbitrary>], iteration_bounds = array<i64: 2, 1, 1>, scalar_prefetch = 0 : i64, scratch_operands = 1 : i64, tpu.core_type = #tpu.core_type<tc>, window_params = [{pipeline_mode = #tpu.pipeline_mode<synchronous>, transform_indices = @transform_0, window_bounds = array<i64: 32, 32>}, {transform_indices = @transform_1, window_bounds = array<i64: 1, 8, 32>}, {transform_indices = @transform_2, window_bounds = array<i64: 1, 8, 32>}, {transform_indices = @transform_3, window_bounds = array<i64: 1, 8, 8>}]} {
    %c0_i32 = arith.constant 0 : i32
    %0 = arith.cmpi eq, %arg2, %c0_i32 : i32
    %1 = arith.extui %0 : i1 to i32
    %c0_i32_0 = arith.constant 0 : i32
    %2 = arith.cmpi ne, %1, %c0_i32_0 : i32
    scf.if %2 {
      %c0_8 = arith.constant 0 : index
      %c0_9 = arith.constant 0 : index
      %c0_10 = arith.constant 0 : index
      %10 = vector.load %arg4[%c0_8, %c0_9, %c0_10] : memref<1x8x32xf32, #tpu.memory_space<vmem>>, vector<1x8x32xf32>
      %11 = vector.shape_cast %10 : vector<1x8x32xf32> to vector<8x32xf32>
      %c0_11 = arith.constant 0 : index
      %c0_12 = arith.constant 0 : index
      %12 = vector.load %arg3[%c0_11, %c0_12] : memref<32x32xf32, #tpu.memory_space<vmem>>, vector<32x32xf32>
      %cst_13 = arith.constant dense<0.000000e+00> : vector<8x32xf32>
      %13 = tpu.matmul %11, %12, %cst_13 {dimension_numbers = #tpu.dot_dimension_numbers<[1], [0], [0], [1], [0, 0, 1, 1], [], []>} : vector<8x32xf32>, vector<32x32xf32>, vector<8x32xf32> -> vector<8x32xf32>
      %c0_14 = arith.constant 0 : index
      %c0_15 = arith.constant 0 : index
      %14 = vector.load %arg7[%c0_14, %c0_15] : memref<8x32xf32, #tpu.memory_space<vmem>>, vector<8x32xf32>
      tpu.vector_store %arg7[%c0_14, %c0_15], %13 {strides = array<i32>} : memref<8x32xf32, #tpu.memory_space<vmem>>, vector<8x32xf32>,
    } else {
    }
    %c0 = arith.constant 0 : index
    %c0_1 = arith.constant 0 : index
    %c0_2 = arith.constant 0 : index
    %3 = vector.load %arg5[%c0, %c0_1, %c0_2] : memref<1x8x32xf32, #tpu.memory_space<vmem>>, vector<1x8x32xf32>
    %4 = vector.shape_cast %3 : vector<1x8x32xf32> to vector<8x32xf32>
    %c0_3 = arith.constant 0 : index
    %c0_4 = arith.constant 0 : index
    %5 = vector.load %arg7[%c0_3, %c0_4] : memref<8x32xf32, #tpu.memory_space<vmem>>, vector<8x32xf32>
    %cst = arith.constant dense<0.000000e+00> : vector<8x8xf32>
    %6 = tpu.matmul %5, %4, %cst {dimension_numbers = #tpu.dot_dimension_numbers<[1], [1], [0], [0], [0, 0, 1, 0], [], []>} : vector<8x32xf32>, vector<8x32xf32>, vector<8x8xf32> -> vector<8x8xf32>
    %c0_5 = arith.constant 0 : index
    %c0_6 = arith.constant 0 : index
    %c0_7 = arith.constant 0 : index
    %7 = vector.load %arg6[%c0_5, %c0_6, %c0_7] : memref<1x8x8xf32, #tpu.memory_space<vmem>>, vector<1x8x8xf32>
    %8 = vector.shape_cast %7 : vector<1x8x8xf32> to vector<8x8xf32>
    %9 = vector.shape_cast %6 : vector<8x8xf32> to vector<1x8x8xf32>
    tpu.vector_store %arg6[%c0_5, %c0_6, %c0_7], %9 {strides = array<i32>} : memref<1x8x8xf32, #tpu.memory_space<vmem>>, vector<1x8x8xf32>,
    return
  }
  func.func @transform_0(%arg0: i32, %arg1: i32, %arg2: i32) -> (i32, i32) {
    %c0_i32 = arith.constant 0 : i32
    %c0_i32_0 = arith.constant 0 : i32
    %c0_i32_1 = arith.constant 0 : i32
    return %c0_i32, %c0_i32_0 : i32, i32
  }
  func.func @transform_1(%arg0: i32, %arg1: i32, %arg2: i32) -> (i32, i32, i32) {
    %c0_i32 = arith.constant 0 : i32
    %c0_i32_0 = arith.constant 0 : i32
    return %arg0, %arg1, %c0_i32 : i32, i32, i32
  }
  func.func @transform_2(%arg0: i32, %arg1: i32, %arg2: i32) -> (i32, i32, i32) {
    %c0_i32 = arith.constant 0 : i32
    %c0_i32_0 = arith.constant 0 : i32
    return %arg0, %arg2, %c0_i32 : i32, i32, i32
  }
  func.func @transform_3(%arg0: i32, %arg1: i32, %arg2: i32) -> (i32, i32, i32) {
    %c0_i32 = arith.constant 0 : i32
    return %arg0, %arg1, %arg2 : i32, i32, i32
  }
}

</mosaic_0001>

<llo_original>
// kernel: tpu_custom_call.1
$region0: #{tpu_custom_call.1}
  #allocation0 [shape = 'u32[]', space=smem, size = 0x4, offset = 0x4, fixed_abs, tag = 'smem constant byte address 0x4 - core index']
  #allocation1 [shape = 'u32[72,128]{1,0:T(1,128)}', space=vmem, size = 0x9000, scoped, tag = 'internal scratch']
  #allocation2 [shape = 'f32[8,32]{1,0:T(8,128)}', space=vmem, size = 0x1000, scoped, tag = 'scratch operand']
  %s0 = inlined_call_operand.hbm [shape: f32[32,32], index: 0, kind: input, shape index: {}]
  %s1 = inlined_call_operand.hbm [shape: f32[2,8,32], index: 1, kind: input, shape index: {}]
  %s2 = inlined_call_operand.hbm [shape: f32[2,8,32], index: 2, kind: input, shape index: {}]
  %s3 = inlined_call_operand.hbm [shape: f32[2,8,8], index: 3, kind: output, shape index: {}]
  %s4 = sld [smem:[#allocation0]]
  $region61: #{tpu_custom_call.1} parent=0
    _
  %s6 = ssub.s32 1, %s4
  %s7 = scalar_select 0, %s6, %s4
  $region1: #{tpu_custom_call.1} parent=0
    #allocation3 [shape = 'u8[16384]{0}', space=vmem, size = 0x4000, scoped, tag = 'input window, operand 0, single buffered']
    #allocation4 [shape = 's32[2]{0}', space=sflag, size = 0x8, scoped, tag = 'scoped memory for tpu_custom_call.1']
    #allocation5 [shape = 's32[2]{0}', space=sflag, size = 0x8, scoped, tag = 'scoped memory for tpu_custom_call.1']
    #allocation6 [shape = 'u8[8192]{0}', space=vmem, size = 0x2000, scoped, tag = 'input window, operand 1']
    #allocation7 [shape = 's32[2]{0}', space=sflag, size = 0x8, scoped, tag = 'scoped memory for tpu_custom_call.1']
    #allocation8 [shape = 'u8[8192]{0}', space=vmem, size = 0x2000, scoped, tag = 'input window, operand 2']
    #allocation9 [shape = 'u8[8192]{0}', space=vmem, size = 0x2000, scoped, tag = 'output window, operand 0']
    %8 = vsyncpa [#allocation4], 0
    %9 = vsyncpa [#allocation7], 0
    %s10 = scalar_lea.sflag [#allocation7], 1
    %11 = vsyncpa %s10, 0
    %12 = vsyncpa [#allocation5], 0
    %s13 = scalar_lea.sflag [#allocation5], 1
    %14 = vsyncpa %s13, 0
    loop: start=0, step=1, limit=4
    $region2: #{tpu_custom_call.1} parent=1 // loop_pre_header
      _
    $region3: #{tpu_custom_call.1} parent=1 // loop_header
      %s16 = sphi 0, %s20
      %p17 = scmp.ge.s32.totalorder %s16, 4
      %s23 = sphi 0, %s42
      %s24 = sphi 0, %s38
      %s25 = sphi 0, %s34
      %s26 = sphi 0, %s23
      %s27 = sphi 0, %s24
      %s28 = sphi 0, %s25
      %s29 = sphi 0, %s26
      %s30 = sphi 0, %s27
      %s31 = sphi 0, %s28
      %s43 = sphi 0, %s43
      %s45 = sphi 0, %s43
      %s46 = sphi 0, %s45
      %s60 = sphi 0, %s46
      %s68 = sphi 0, %s70
      %s71 = sphi 0, %s68
      %s72 = sphi 0, %s71
      %s88 = sphi 0, %s72
      %s96 = sphi 0, %s98
      %s99 = sphi 0, %s96
      %s100 = sphi 0, %s99
      %s116 = sphi 0, %s100
      %s126 = sphi 0, %s128
      %s129 = sphi 0, %s126
      %s130 = sphi 0, %s129
      %s146 = sphi 0, %s130
    $region4: #{tpu_custom_call.1} parent=1 // loop_header_branch
      %19 = sbr.rel (%p17) target = $region8
    $region5: #{tpu_custom_call.1} parent=1 // loop_body
      %s21 = ssub.s32 %s16, 1
      %s22 = ssub.s32 %s16, 2
      %s32 = sadd.s32 1, %s25
      %p33 = scmp.ge.s32.totalorder %s32, 1
      %s34 = scalar_select %p33, 0, %s32
      %s35 = sadd.s32 1, %s24
      %s36 = scalar_select %p33, %s35, %s24
      %p37 = scmp.ge.s32.totalorder %s36, 1
      %s38 = scalar_select %p37, 0, %s36
      %s39 = sadd.s32 1, %s23
      %s40 = scalar_select %p37, %s39, %s23
      %p41 = scmp.ge.s32.totalorder %s40, 2
      %s42 = scalar_select %p41, 0, %s40
      %s44 = sadd.s32 %s43, 1
      %p47 = scmp.eq.s32.totalorder %s16, 1
      %p48 = scmp.ne.s32.totalorder %s43, %s45
      %p49 = scmp.eq.s32.totalorder %s16, 0
      %p50 = por %p48, %p49
      %p51 = scmp.ne.s32.totalorder %s43, %s45
      %p52 = scmp.eq.s32.totalorder %s21, 1
      %p53 = por %p51, %p52
      %p54 = scmp.ne.s32.totalorder %s45, %s46
      %p55 = scmp.eq.s32.totalorder %s21, 0
      %p56 = por %p54, %p55
      %p57 = scmp.ne.s32.totalorder %s45, %s46
      %p58 = scmp.eq.s32.totalorder %s22, 1
      %p59 = por %p57, %p58
      %p61 = scmp.ne.s32.totalorder %s46, %s60
      %p62 = scmp.eq.s32.totalorder %s22, 0
      %p63 = por %p61, %p62
      %s64 = ssub.s32 %s23, %s42
      %s65 = ssub.s32 %s24, %s38
      %s66 = sor.u32 %s64, %s65
      %p67 = scmp.eq.s32.totalorder %s66, 0
      %s69 = sadd.s32 %s68, 1
      %s70 = scalar_select %p67, %s68, %s69
      %p73 = pneg %p67
      %p74 = scmp.eq.s32.totalorder %s16, 1
      %p75 = por %p73, %p74
      %p76 = scmp.ne.s32.totalorder %s68, %s71
      %p77 = scmp.eq.s32.totalorder %s16, 0
      %p78 = por %p76, %p77
      %p79 = scmp.ne.s32.totalorder %s68, %s71
      %p80 = scmp.eq.s32.totalorder %s21, 1
      %p81 = por %p79, %p80
      %p82 = scmp.ne.s32.totalorder %s71, %s72
      %p83 = scmp.eq.s32.totalorder %s21, 0
      %p84 = por %p82, %p83
      %p85 = scmp.ne.s32.totalorder %s71, %s72
      %p86 = scmp.eq.s32.totalorder %s22, 1
      %p87 = por %p85, %p86
      %p89 = scmp.ne.s32.totalorder %s72, %s88
      %p90 = scmp.eq.s32.totalorder %s22, 0
      %p91 = por %p89, %p90
      %s92 = ssub.s32 %s23, %s42
      %s93 = ssub.s32 %s25, %s34
      %s94 = sor.u32 %s92, %s93
      %p95 = scmp.eq.s32.totalorder %s94, 0
      %s97 = sadd.s32 %s96, 1
      %s98 = scalar_select %p95, %s96, %s97
      %p101 = pneg %p95
      %p102 = scmp.eq.s32.totalorder %s16, 1
      %p103 = por %p101, %p102
      %p104 = scmp.ne.s32.totalorder %s96, %s99
      %p105 = scmp.eq.s32.totalorder %s16, 0
      %p106 = por %p104, %p105
      %p107 = scmp.ne.s32.totalorder %s96, %s99
      %p108 = scmp.eq.s32.totalorder %s21, 1
      %p109 = por %p107, %p108
      %p110 = scmp.ne.s32.totalorder %s99, %s100
      %p111 = scmp.eq.s32.totalorder %s21, 0
      %p112 = por %p110, %p111
      %p113 = scmp.ne.s32.totalorder %s99, %s100
      %p114 = scmp.eq.s32.totalorder %s22, 1
      %p115 = por %p113, %p114
      %p117 = scmp.ne.s32.totalorder %s100, %s116
      %p118 = scmp.eq.s32.totalorder %s22, 0
      %p119 = por %p117, %p118
      %s120 = ssub.s32 %s23, %s42
      %s121 = ssub.s32 %s24, %s38
      %s122 = sor.u32 %s120, %s121
      %s123 = ssub.s32 %s25, %s34
      %s124 = sor.u32 %s122, %s123
      %p125 = scmp.eq.s32.totalorder %s124, 0
      %s127 = sadd.s32 %s126, 1
      %s128 = scalar_select %p125, %s126, %s127
      %p131 = pneg %p125
      %p132 = scmp.eq.s32.totalorder %s16, 1
      %p133 = por %p131, %p132
      %p134 = scmp.ne.s32.totalorder %s126, %s129
      %p135 = scmp.eq.s32.totalorder %s16, 0
      %p136 = por %p134, %p135
      %p137 = scmp.ne.s32.totalorder %s126, %s129
      %p138 = scmp.eq.s32.totalorder %s21, 1
      %p139 = por %p137, %p138
      %p140 = scmp.ne.s32.totalorder %s129, %s130
      %p141 = scmp.eq.s32.totalorder %s21, 0
      %p142 = por %p140, %p141
      %p143 = scmp.ne.s32.totalorder %s129, %s130
      %p144 = scmp.eq.s32.totalorder %s22, 1
      %p145 = por %p143, %p144
      %p147 = scmp.ne.s32.totalorder %s130, %s146
      %p148 = scmp.eq.s32.totalorder %s22, 0
      %p149 = por %p147, %p148
      %p150 = scmp.le.s32.totalorder 1, %s16
      %p151 = scmp.lt.s32.totalorder %s16, 3
      %p152 = pnand %p150, %p151
      %p153 = pneg %p152
      // Predicated region
      $region9: #{tpu_custom_call.1} parent=5 // pred_check
        _
      $region10: #{tpu_custom_call.1} parent=5 // pred_check_branch
        %155 = sbr.rel (%p152) target = $region12
      $region11: #{tpu_custom_call.1} parent=5 // pred_region
        %s156 = ssub.s32 %s16, 1
        // Predicated region
        $region13: #{tpu_custom_call.1} parent=11 // pred_check
          %p157 = pneg %p56
        $region14: #{tpu_custom_call.1} parent=11 // pred_check_branch
          %159 = sbr.rel (%p157) target = $region16
        $region15: #{tpu_custom_call.1} parent=11 // pred_region
          %161 = vsyncadd [#allocation4], 0
          %s162 = sshll.u32 %s0, 4
          %s163 = int_to_ptr.hbm [resolvable:$true] %s162
          %s164 = sshll.u32 [#allocation3], 4
          %s165 = int_to_ptr.vmem [resolvable:$true] %s164
          %170 = dma.hbm_to_vmem [thread:$0]  %s163, 512, %s165, [#allocation4], 128, 128, 8
        $region16: #{tpu_custom_call.1} parent=11 // pred_fallthru
          _
      $region12: #{tpu_custom_call.1} parent=5 // pred_fallthru
        _
      %p171 = scmp.lt.s32.totalorder %s16, 2
      // Predicated region
      $region17: #{tpu_custom_call.1} parent=5 // pred_check
        %p172 = pneg %p171
      $region18: #{tpu_custom_call.1} parent=5 // pred_check_branch
        %174 = sbr.rel (%p172) target = $region20
      $region19: #{tpu_custom_call.1} parent=5 // pred_region
        // Predicated region
        $region21: #{tpu_custom_call.1} parent=19 // pred_check
          %p175 = pneg %p78
        $region22: #{tpu_custom_call.1} parent=19 // pred_check_branch
          %177 = sbr.rel (%p175) target = $region24
        $region23: #{tpu_custom_call.1} parent=19 // pred_region
          %s178 = sand.u32 %s16, 1
          %s179 = scalar_lea.sflag [#allocation7], %s178
          %s180 = sand.u32 %s68, 1
          %s181 = smul.addr %s180, 8
          %s182 = scalar_lea.vmem [#allocation6], %s181
          %184 = vsyncadd %s179, 0
          %s185 = sadd.s32 %s24, %s23
          %s186 = smul.addr %s185, 8
          %s187 = scalar_lea.hbm %s1, %s186
          %s189 = sshll.u32 %s187, 4
          %s190 = int_to_ptr.hbm [resolvable:$true] %s189
          %s191 = sshll.u32 %s182, 4
          %s192 = int_to_ptr.vmem [resolvable:$true] %s191
          %194 = dma.hbm_to_vmem [thread:$0]  %s190, 128, %s192, %s179
        $region24: #{tpu_custom_call.1} parent=19 // pred_fallthru
          _
        // Predicated region
        $region25: #{tpu_custom_call.1} parent=19 // pred_check
          %p195 = pneg %p106
        $region26: #{tpu_custom_call.1} parent=19 // pred_check_branch
          %197 = sbr.rel (%p195) target = $region28
        $region27: #{tpu_custom_call.1} parent=19 // pred_region
          %s198 = sand.u32 %s16, 1
          %s199 = scalar_lea.sflag [#allocation7], %s198
          %s200 = sand.u32 %s96, 1
          %s201 = smul.addr %s200, 8
          %s202 = scalar_lea.vmem [#allocation8], %s201
          %204 = vsyncadd %s199, 0
          %s205 = sadd.s32 %s25, %s23
          %s206 = smul.addr %s205, 8
          %s207 = scalar_lea.hbm %s2, %s206
          %s209 = sshll.u32 %s207, 4
          %s210 = int_to_ptr.hbm [resolvable:$true] %s209
          %s211 = sshll.u32 %s202, 4
          %s212 = int_to_ptr.vmem [resolvable:$true] %s211
          %214 = dma.hbm_to_vmem [thread:$0]  %s210, 128, %s212, %s199
        $region28: #{tpu_custom_call.1} parent=19 // pred_fallthru
          _
      $region20: #{tpu_custom_call.1} parent=5 // pred_fallthru
        _
      %p215 = scmp.le.s32.totalorder 1, %s16
      %p216 = scmp.lt.s32.totalorder %s16, 3
      %p217 = pnand %p215, %p216
      %p218 = pneg %p217
      // Predicated region
      $region29: #{tpu_custom_call.1} parent=5 // pred_check
        _
      $region30: #{tpu_custom_call.1} parent=5 // pred_check_branch
        %220 = sbr.rel (%p217) target = $region32
      $region31: #{tpu_custom_call.1} parent=5 // pred_region
        %s221 = ssub.s32 %s16, 1
        // Predicated region
        $region33: #{tpu_custom_call.1} parent=31 // pred_check
          %p222 = pneg %p56
        $region34: #{tpu_custom_call.1} parent=31 // pred_check_branch
          %224 = sbr.rel (%p222) target = $region36
        $region35: #{tpu_custom_call.1} parent=31 // pred_region
          %226 = dma.done [#allocation4], 512
        $region36: #{tpu_custom_call.1} parent=31 // pred_fallthru
          _
        %s227 = sand.u32 %s21, 1
        %s228 = scalar_lea.sflag [#allocation7], %s227
        %s229 = sand.u32 %s71, 1
        %s230 = smul.addr %s229, 8
        %s231 = scalar_lea.vmem [#allocation6], %s230
        // Predicated region
        $region37: #{tpu_custom_call.1} parent=31 // pred_check
          %p232 = pneg %p84
        $region38: #{tpu_custom_call.1} parent=31 // pred_check_branch
          %234 = sbr.rel (%p232) target = $region40
        $region39: #{tpu_custom_call.1} parent=31 // pred_region
          %236 = dma.done %s228, 128
        $region40: #{tpu_custom_call.1} parent=31 // pred_fallthru
          _
        %s237 = sand.u32 %s21, 1
        %s238 = scalar_lea.sflag [#allocation7], %s237
        %s239 = sand.u32 %s99, 1
        %s240 = smul.addr %s239, 8
        %s241 = scalar_lea.vmem [#allocation8], %s240
        // Predicated region
        $region41: #{tpu_custom_call.1} parent=31 // pred_check
          %p242 = pneg %p112
        $region42: #{tpu_custom_call.1} parent=31 // pred_check_branch
          %244 = sbr.rel (%p242) target = $region44
        $region43: #{tpu_custom_call.1} parent=31 // pred_region
          %246 = dma.done %s238, 128
        $region44: #{tpu_custom_call.1} parent=31 // pred_fallthru
          _
        %p247 = pneg %p56
        %p248 = pneg %p53
        %s249 = sand.u32 %s21, 1
        %s250 = scalar_lea.sflag [#allocation7], %s249
        %s251 = sand.u32 %s71, 1
        %s252 = smul.addr %s251, 8
        %s253 = scalar_lea.vmem [#allocation6], %s252
        %p254 = pneg %p84
        %p255 = pneg %p81
        %s256 = sand.u32 %s21, 1
        %s257 = scalar_lea.sflag [#allocation7], %s256
        %s258 = sand.u32 %s99, 1
        %s259 = smul.addr %s258, 8
        %s260 = scalar_lea.vmem [#allocation8], %s259
        %p261 = pneg %p112
        %p262 = pneg %p109
        %p263 = pneg %p142
        %p264 = pneg %p139
        %s265 = sand.u32 %s129, 1
        %s266 = scalar_lea.sflag [#allocation5], %s265
        %s267 = sand.u32 %s129, 1
        %s268 = smul.addr %s267, 8
        %s269 = scalar_lea.vmem [#allocation9], %s268
        %p270 = scmp.eq.s32.totalorder %s28, 0
        // Predicated region
        $region45: #{tpu_custom_call.1} parent=31 // pred_check
          %p271 = pneg %p270
        $region46: #{tpu_custom_call.1} parent=31 // pred_check_branch
          %273 = sbr.rel (%p271) target = $region48
        $region47: #{tpu_custom_call.1} parent=31 // pred_region
          %v274 = vld [vmem:[%s231] sm:$0xff]
          %v275 = vld [vmem:[#allocation3] sm:$0xff]
          %v276 = vld [vmem:[#allocation3 + $0x8] sm:$0xff]
          %v277 = vld [vmem:[#allocation3 + $0x10] sm:$0xff]
          %v278 = vld [vmem:[#allocation3 + $0x18] sm:$0xff]
          %vm279 = vcmask 261120
          %v281 = vsel %vm279, %v274, 0
          %283 = vmatpush.msra.mxu0 0.0
          %284 = vmatpush.msra.mxu0 0.0
          %285 = vmatpush.msra.mxu0 0.0
          %286 = vmatpush.msra.mxu0 0.0
          %287 = vmatpush.msra.mxu0 0.0
          %288 = vmatpush.msra.mxu0 0.0
          %289 = vmatpush.msra.mxu0 0.0
          %290 = vmatpush.msra.mxu0 0.0
          %291 = vmatpush.msra.mxu0 0.0
          %292 = vmatpush.msra.mxu0 0.0
          %293 = vmatpush.msra.mxu0 0.0
          %294 = vmatpush.msra.mxu0 0.0
          %295 = vmatpush.msra.mxu0 %v278
          %296 = vmatpush.msra.mxu0 %v277
          %297 = vmatpush.msra.mxu0 %v276
          %298 = vmatpush.msra.mxu0 %v275
          %299 = vmatmul.f32.gmra.mxu0 %v281
          %v300 = vpop.f32.mrf.mxu0
          %v301 = vadd.f32 0.0, %v300
          %302 = vdwg.mxu0
          %303 = vst.msk [vmem:[#allocation2] sm:$0xff] %vm279, %v301
        $region48: #{tpu_custom_call.1} parent=31 // pred_fallthru
          _
        %v304 = vld [vmem:[%s241] sm:$0xff]
        %v305 = vld [vmem:[#allocation2] sm:$0xff]
        %vm306 = vcmask 261120
        %v308 = vsel %vm306, %v305, 0
        %v311 = vsel %vm306, %v304, 0
        %313 = vmatpush.xpose.msra.mxu0 0.0
        %314 = vmatpush.xpose.msra.mxu0 0.0
        %315 = vmatpush.xpose.msra.mxu0 0.0
        %316 = vmatpush.xpose.msra.mxu0 0.0
        %317 = vmatpush.xpose.msra.mxu0 0.0
        %318 = vmatpush.xpose.msra.mxu0 0.0
        %319 = vmatpush.xpose.msra.mxu0 0.0
        %320 = vmatpush.xpose.msra.mxu0 0.0
        %321 = vmatpush.xpose.msra.mxu0 0.0
        %322 = vmatpush.xpose.msra.mxu0 0.0
        %323 = vmatpush.xpose.msra.mxu0 0.0
        %324 = vmatpush.xpose.msra.mxu0 0.0
        %325 = vmatpush.xpose.msra.mxu0 0.0
        %326 = vmatpush.xpose.msra.mxu0 0.0
        %327 = vmatpush.xpose.msra.mxu0 0.0
        %328 = vmatpush.xpose.msra.mxu0 %v311
        %329 = vmatmul.f32.gmra.mxu0 %v308
        %v330 = vpop.f32.mrf.mxu0
        %v331 = vadd.f32 0.0, %v330
        %332 = vdwg.mxu0
        %vm333 = vcmask 64512
        %334 = vst.msk [vmem:[%s269] sm:$0xff] %vm333, %v331
        %s335 = sand.u32 %s129, 1
        %s336 = scalar_lea.sflag [#allocation5], %s335
        %s337 = sand.u32 %s129, 1
        %s338 = smul.addr %s337, 8
        %s339 = scalar_lea.vmem [#allocation9], %s338
        // Predicated region
        $region49: #{tpu_custom_call.1} parent=31 // pred_check
          %p340 = pneg %p139
        $region50: #{tpu_custom_call.1} parent=31 // pred_check_branch
          %342 = sbr.rel (%p340) target = $region52
        $region51: #{tpu_custom_call.1} parent=31 // pred_region
          %344 = vsyncadd %s336, 0
          %s345 = sadd.s32 %s28, %s27
          %s346 = sadd.s32 %s345, %s26
          %s347 = smul.addr %s346, 8
          %s348 = scalar_lea.hbm %s3, %s347
          %s350 = sshll.u32 %s339, 4
          %s351 = int_to_ptr.vmem [resolvable:$true] %s350
          %s352 = sshll.u32 %s348, 4
          %s353 = int_to_ptr.hbm [resolvable:$true] %s352
          %355 = dma.vmem_to_hbm [thread:$0]  %s351, 128, %s353, %s336
        $region52: #{tpu_custom_call.1} parent=31 // pred_fallthru
          _
      $region32: #{tpu_custom_call.1} parent=5 // pred_fallthru
        _
      %p356 = scmp.le.s32.totalorder 2, %s16
      // Predicated region
      $region53: #{tpu_custom_call.1} parent=5 // pred_check
        %p357 = pneg %p356
      $region54: #{tpu_custom_call.1} parent=5 // pred_check_branch
        %359 = sbr.rel (%p357) target = $region56
      $region55: #{tpu_custom_call.1} parent=5 // pred_region
        %s360 = ssub.s32 %s16, 2
        // Predicated region
        $region57: #{tpu_custom_call.1} parent=55 // pred_check
          %p361 = pneg %p145
        $region58: #{tpu_custom_call.1} parent=55 // pred_check_branch
          %363 = sbr.rel (%p361) target = $region60
        $region59: #{tpu_custom_call.1} parent=55 // pred_region
          %s364 = sand.u32 %s130, 1
          %s365 = scalar_lea.sflag [#allocation5], %s364
          %s366 = sand.u32 %s130, 1
          %s367 = smul.addr %s366, 8
          %s368 = scalar_lea.vmem [#allocation9], %s367
          %370 = dma.done %s365, 128
        $region60: #{tpu_custom_call.1} parent=55 // pred_fallthru
          _
      $region56: #{tpu_custom_call.1} parent=5 // pred_fallthru
        _
    $region6: #{tpu_custom_call.1} parent=1 // loop_footer
      %s20 = sadd.s32 1, %s16
    $region7: #{tpu_custom_call.1} parent=1 // loop_footer_branch
      %15 = sbr.rel target = $region3
    $region8: #{tpu_custom_call.1} parent=1 // loop_exit
      _
    %371 = vsyncpa [#allocation4], 1
    %s372 = scalar_lea.sflag [#allocation4], 1
    %373 = vsyncpa %s372, 1
    %374 = vsyncpa [#allocation7], 1
    %s375 = scalar_lea.sflag [#allocation7], 1
    %376 = vsyncpa %s375, 1
    %377 = vsyncpa [#allocation5], 1
    %s378 = scalar_lea.sflag [#allocation5], 1
    %379 = vsyncpa %s378, 1

</llo_original>
